<compile_context>
chip_gen: v6e
topology: v6e:2x2x1
jax: 0.10.0
libtpu: 0.0.40
codegen_flags: <defaults>
</compile_context>

<pallas_src>
import functools

import jax
import jax.numpy as jnp
from jax.experimental import pallas as pl
from jax.experimental.pallas import tpu as pltpu


def _round_up(x, m):
    return (x + m - 1) // m * m


def _stats_kernel(x_ref, ps_ref, *, fold, d):
    """Per-point sum / sum-of-squares, interleaved columns.

    x_ref : VMEM [TR, L]   (L = fold*d; folded row r holds points r*fold + j
                            in lanes [j*d, (j+1)*d))
    ps_ref: VMEM f32[TR, 2*fold]  (col 2j = sum of point j, col 2j+1 = sumsq)
    Out-of-bounds rows of a partial last block produce garbage rows that are
    dropped on writeback, so no masking is required.
    """
    xt = x_ref[...].astype(jnp.float32)
    if fold == 1:
        ps_ref[:, 0:1] = jnp.sum(xt, axis=-1, keepdims=True)
        ps_ref[:, 1:2] = jnp.sum(xt * xt, axis=-1, keepdims=True)
    else:
        l = xt.shape[-1]
        pc = ps_ref.shape[-1]
        # Indicator matrices from iota; the two tiny matmuls ride the idle MXU.
        grp = jax.lax.broadcasted_iota(jnp.int32, (l, pc), 0) // d
        col = jax.lax.broadcasted_iota(jnp.int32, (l, pc), 1)
        g_sum = (col == 2 * grp).astype(jnp.float32)
        g_sq = (col == 2 * grp + 1).astype(jnp.float32)
        ps = jnp.dot(xt, g_sum, preferred_element_type=jnp.float32)
        ps = ps + jnp.dot(xt * xt, g_sq, preferred_element_type=jnp.float32)
        ps_ref[...] = ps


def _norm_kernel(x_ref, st_ref, w_ref, b_ref, o_ref, *, fold, d):
    """y = x * (inv_std*w) + ((-mean*inv_std)*w + b).

    x_ref : VMEM [TR, L]
    st_ref: VMEM f32[TR, 2*fold]  (col 2j = inv_std of point j,
                                   col 2j+1 = -mean*inv_std of point j)
    w_ref, b_ref: VMEM f32[1, L]  (weight/bias tiled fold x along lanes)
    o_ref : VMEM [TR, L]
    """
    xt = x_ref[...].astype(jnp.float32)
    st = st_ref[...]
    if fold == 1:
        a = st[:, 0:1]          # inv_std per point, lane-broadcast below
        t = st[:, 1:2]          # -mean*inv_std per point
    else:
        pc = st.shape[-1]
        l = xt.shape[-1]
        grp = jax.lax.broadcasted_iota(jnp.int32, (pc, l), 1) // d
        row = jax.lax.broadcasted_iota(jnp.int32, (pc, l), 0)
        e_scale = (row == 2 * grp).astype(jnp.float32)
        e_shift = (row == 2 * grp + 1).astype(jnp.float32)
        # Expand per-point scalars to per-element lanes with tiny MXU matmuls.
        a = jnp.dot(st, e_scale, preferred_element_type=jnp.float32)
        t = jnp.dot(st, e_shift, preferred_element_type=jnp.float32)
    w = w_ref[...]
    b = b_ref[...]
    o_ref[...] = (xt * (a * w) + (t * w + b)).astype(o_ref.dtype)


def point_layer_norm(x, seqlen, max_seqlen, weight, bias, *, eps=1e-5, affine=True):
    """x: packed points [N, D]; seqlen: int32 CSR offsets [B+1]."""
    del max_seqlen  # not needed: we operate directly on the packed layout
    N, D = x.shape
    B = seqlen.shape[0] - 1

    # ---- lane-dense fold (only when it is a free bitcast) -------------------
    fold = 128 // D if (D < 128 and 128 % D == 0) else 1
    if N % fold != 0:
        fold = 1                      # ragged: stay packed, zero extra copies
    L = fold * D
    nf = N // fold                    # folded rows (exact, no padding rows)
    pc = 2 * fold                     # per-point stats columns (interleaved)

    # ---- tile sizing ---------------------------------------------------------
    # dtype-aware sublane quantum (f32: 8, bf16: 16, int8/fp8: 32)
    sub = max(8, 32 // jnp.dtype(x.dtype).itemsize)
    # ~1 MiB (f32-equivalent) x-blocks; pass-2 double-buffered footprint stays
    # ~4.5 MiB, well inside v5e's 16 MiB scoped limit and v7x's 64 MiB VMEM.
    max_trf = max(sub, (1 << 20) // (L * 4))
    num_tiles = -(-nf // max_trf)
    if num_tiles < 2 and nf >= 2 * sub:
        num_tiles = 2                 # keep both v7x TensorCores busy
    if num_tiles <= 1:
        trf = max(nf, 1)              # single block == full array (always legal)
    else:
        num_tiles = _round_up(num_tiles, 2)          # balanced megacore split
        trf = _round_up(-(-nf // num_tiles), sub)
    grid = (pl.cdiv(nf, trf),)        # last block may be partial (OOB handled)

    x_f = x.reshape(nf, L)            # free row-major split/merge of trailing dims

    # ---- pass 1 (Pallas): per-point sum / sumsq ------------------------------
    ps = pl.pallas_call(
        functools.partial(_stats_kernel, fold=fold, d=D),
        out_shape=jax.ShapeDtypeStruct((nf, pc), jnp.float32),
        grid=grid,
        in_specs=[pl.BlockSpec((trf, L), lambda i: (i, 0))],
        out_specs=pl.BlockSpec((trf, pc), lambda i: (i, 0)),
        compiler_params=pltpu.CompilerParams(dimension_semantics=("parallel",)),
    )(x_f)

    # ---- tiny O(N)/O(B) glue (fused under one jit) ---------------------------
    lengths = seqlen[1:] - seqlen[:-1]                                   # [B]
    ids = jnp.arange(N, dtype=jnp.int32)
    bidx = jnp.searchsorted(seqlen, ids, side="right").astype(jnp.int32) - 1

    stats_pt = ps.reshape(N, 2)                         # [sum, sumsq] per point (bitcast)
    b_stats = jax.ops.segment_sum(stats_pt, bidx, num_segments=B)        # [B, 2]
    inv_cnt = 1.0 / jnp.maximum(lengths.astype(jnp.float32) * D, 1.0)    # guard len == 0
    mean = b_stats[:, 0] * inv_cnt
    var = jnp.maximum(b_stats[:, 1] * inv_cnt - mean * mean, 0.0)        # clamped
    inv_std = jax.lax.rsqrt(var + eps)                                   # scalar rsqrt
    params = jnp.stack([inv_std, -mean * inv_std], axis=-1)              # [B, 2]
    st = params[bidx].reshape(nf, pc)                                    # one gather, free reshape

    if affine:
        w_l = jnp.tile(weight.reshape(1, D).astype(jnp.float32), (1, fold))
        b_l = jnp.tile(bias.reshape(1, D).astype(jnp.float32), (1, fold))
    else:
        w_l = jnp.ones((1, L), jnp.float32)
        b_l = jnp.zeros((1, L), jnp.float32)

    # ---- pass 2 (Pallas): normalize + affine, lane-dense in and out ----------
    y_f = pl.pallas_call(
        functools.partial(_norm_kernel, fold=fold, d=D),
        out_shape=jax.ShapeDtypeStruct((nf, L), x.dtype),
        grid=grid,
        in_specs=[
            pl.BlockSpec((trf, L), lambda i: (i, 0)),
            pl.BlockSpec((trf, pc), lambda i: (i, 0)),
            pl.BlockSpec((1, L), lambda i: (0, 0)),
            pl.BlockSpec((1, L), lambda i: (0, 0)),
        ],
        out_specs=pl.BlockSpec((trf, L), lambda i: (i, 0)),
        compiler_params=pltpu.CompilerParams(dimension_semantics=("parallel",)),
    )(x_f, st, w_l, b_l)

    return y_f.reshape(N, D)          # free bitcast back to the packed layout


def point_layer_norm_ref(x, seqlen, weight, bias, *, eps=1e-5):
    """Pure-JAX reference mirroring the PyTorch forward (two-pass)."""
    N, D = x.shape
    B = seqlen.shape[0] - 1
    ids = jnp.arange(N, dtype=jnp.int32)
    bidx = jnp.searchsorted(seqlen, ids, side="right").astype(jnp.int32) - 1
    counts = jax.ops.segment_sum(jnp.ones((N,), x.dtype), bidx, num_segments=B)

    point_mean = x.mean(axis=1, keepdims=True)                           # [N,1]
    mean = jax.ops.segment_sum(point_mean, bidx, num_segments=B) / counts[:, None]
    x_hat = x - mean[bidx]
    var = jax.ops.segment_sum(x_hat ** 2, bidx, num_segments=B) / counts[:, None]
    var = var.mean(axis=-1, keepdims=True)
    std = jnp.sqrt(var + eps)[bidx]
    x_hat = x_hat / std
    return x_hat * weight + bias


if __name__ == "__main__":
    key = jax.random.PRNGKey(0)
    dim = 32
    kx, kw, kb = jax.random.split(key, 3)
    weight = jnp.ones((1, dim), jnp.float32) + 0.1 * jax.random.normal(kw, (1, dim))
    bias = 0.1 * jax.random.normal(kb, (1, dim), dtype=jnp.float32)

    fn = jax.jit(point_layer_norm, static_argnames=("eps", "affine"))

    cases = [
        jnp.array([0, 5, 13], dtype=jnp.int32),            # ragged N -> packed (fold=1) path
        jnp.array([0, 6, 16], dtype=jnp.int32),            # aligned N -> lane-dense folded path
        jnp.array([0, 300, 650, 1000], dtype=jnp.int32),   # 2 tiles + partial last block
    ]
    for i, seqlen in enumerate(cases):
        N = int(seqlen[-1])
        max_seqlen = int(jnp.max(seqlen[1:] - seqlen[:-1]))
        x = jax.random.normal(jax.random.fold_in(kx, i), (N, dim), dtype=jnp.float32)

        out = fn(x, seqlen, max_seqlen, weight, bias, eps=1e-5, affine=True)
        out = jax.block_until_ready(out)

        ref = point_layer_norm_ref(x, seqlen, weight, bias, eps=1e-5)
        assert out.shape == (N, dim)
        err = float(jnp.max(jnp.abs(out - ref)))
        assert jnp.allclose(out, ref, atol=1e-4, rtol=1e-4), err

    print("KERNEL_OK")
</pallas_src>

<mosaic_0001>
module attributes {stable_mosaic.version = 11 : i64} {
  func.func @_stats_kernel(%arg0: i32, %arg1: memref<13x32xf32, #tpu.memory_space<vmem>>, %arg2: memref<13x2xf32, #tpu.memory_space<vmem>>) attributes {dimension_semantics = [#tpu.dimension_semantics<parallel>], iteration_bounds = array<i64: 1>, scalar_prefetch = 0 : i64, scratch_operands = 0 : i64, tpu.core_type = #tpu.core_type<tc>, window_params = [{transform_indices = @transform_0, window_bounds = array<i64: 13, 32>}, {transform_indices = @transform_1, window_bounds = array<i64: 13, 2>}]} {
    %c0 = arith.constant 0 : index
    %c0_0 = arith.constant 0 : index
    %0 = vector.load %arg1[%c0, %c0_0] : memref<13x32xf32, #tpu.memory_space<vmem>>, vector<13x32xf32>
    %cst = arith.constant dense<0.000000e+00> : vector<13xf32>
    %1 = vector.multi_reduction <add>, %0, %cst [1] : vector<13x32xf32> to vector<13xf32>
    %2 = vector.shape_cast %1 : vector<13xf32> to vector<13x1xf32>
    %c0_1 = arith.constant 0 : index
    %c0_2 = arith.constant 0 : index
    %3 = vector.load %arg2[%c0_1, %c0_2] : memref<13x2xf32, #tpu.memory_space<vmem>>, vector<13x1xf32>
    tpu.vector_store %arg2[%c0_1, %c0_2], %2 {strides = array<i32>} : memref<13x2xf32, #tpu.memory_space<vmem>>, vector<13x1xf32>,
    %4 = arith.mulf %0, %0 : vector<13x32xf32>
    %cst_3 = arith.constant dense<0.000000e+00> : vector<13xf32>
    %5 = vector.multi_reduction <add>, %4, %cst_3 [1] : vector<13x32xf32> to vector<13xf32>
    %6 = vector.shape_cast %5 : vector<13xf32> to vector<13x1xf32>
    %c0_4 = arith.constant 0 : index
    %c1 = arith.constant 1 : index
    %7 = vector.load %arg2[%c0_4, %c1] : memref<13x2xf32, #tpu.memory_space<vmem>>, vector<13x1xf32>
    tpu.vector_store %arg2[%c0_4, %c1], %6 {strides = array<i32>} : memref<13x2xf32, #tpu.memory_space<vmem>>, vector<13x1xf32>,
    return
  }
  func.func @transform_0(%arg0: i32) -> (i32, i32) {
    %c0_i32 = arith.constant 0 : i32
    %c0_i32_0 = arith.constant 0 : i32
    return %arg0, %c0_i32 : i32, i32
  }
  func.func @transform_1(%arg0: i32) -> (i32, i32) {
    %c0_i32 = arith.constant 0 : i32
    %c0_i32_0 = arith.constant 0 : i32
    return %arg0, %c0_i32 : i32, i32
  }
}

module attributes {stable_mosaic.version = 11 : i64} {
  func.func @_norm_kernel(%arg0: i32, %arg1: memref<13x32xf32, #tpu.memory_space<vmem>>, %arg2: memref<13x2xf32, #tpu.memory_space<vmem>>, %arg3: memref<1x32xf32, #tpu.memory_space<vmem>>, %arg4: memref<1x32xf32, #tpu.memory_space<vmem>>, %arg5: memref<13x32xf32, #tpu.memory_space<vmem>>) attributes {dimension_semantics = [#tpu.dimension_semantics<parallel>], iteration_bounds = array<i64: 1>, scalar_prefetch = 0 : i64, scratch_operands = 0 : i64, tpu.core_type = #tpu.core_type<tc>, window_params = [{transform_indices = @transform_0, window_bounds = array<i64: 13, 32>}, {transform_indices = @transform_1, window_bounds = array<i64: 13, 2>}, {pipeline_mode = #tpu.pipeline_mode<synchronous>, transform_indices = @transform_2, window_bounds = array<i64: 1, 32>}, {pipeline_mode = #tpu.pipeline_mode<synchronous>, transform_indices = @transform_3, window_bounds = array<i64: 1, 32>}, {transform_indices = @transform_4, window_bounds = array<i64: 13, 32>}]} {
    %c0 = arith.constant 0 : index
    %c0_0 = arith.constant 0 : index
    %0 = vector.load %arg1[%c0, %c0_0] : memref<13x32xf32, #tpu.memory_space<vmem>>, vector<13x32xf32>
    %c0_1 = arith.constant 0 : index
    %c0_2 = arith.constant 0 : index
    %1 = vector.load %arg2[%c0_1, %c0_2] : memref<13x2xf32, #tpu.memory_space<vmem>>, vector<13x2xf32>
    %2 = vector.extract_strided_slice %1 {offsets = [0, 0], sizes = [13, 1], strides = [1, 1]} : vector<13x2xf32> to vector<13x1xf32>
    %3 = vector.extract_strided_slice %1 {offsets = [0, 1], sizes = [13, 1], strides = [1, 1]} : vector<13x2xf32> to vector<13x1xf32>
    %c0_3 = arith.constant 0 : index
    %c0_4 = arith.constant 0 : index
    %4 = vector.load %arg3[%c0_3, %c0_4] : memref<1x32xf32, #tpu.memory_space<vmem>>, vector<1x32xf32>
    %c0_5 = arith.constant 0 : index
    %c0_6 = arith.constant 0 : index
    %5 = vector.load %arg4[%c0_5, %c0_6] : memref<1x32xf32, #tpu.memory_space<vmem>>, vector<1x32xf32>
    %6 = vector.broadcast %2 : vector<13x1xf32> to vector<13x32xf32>
    %7 = vector.broadcast %4 : vector<1x32xf32> to vector<13x32xf32>
    %8 = arith.mulf %6, %7 : vector<13x32xf32>
    %9 = arith.mulf %0, %8 : vector<13x32xf32>
    %10 = vector.broadcast %3 : vector<13x1xf32> to vector<13x32xf32>
    %11 = vector.broadcast %4 : vector<1x32xf32> to vector<13x32xf32>
    %12 = arith.mulf %10, %11 : vector<13x32xf32>
    %13 = vector.broadcast %5 : vector<1x32xf32> to vector<13x32xf32>
    %14 = arith.addf %12, %13 : vector<13x32xf32>
    %15 = arith.addf %9, %14 : vector<13x32xf32>
    %c0_7 = arith.constant 0 : index
    %c0_8 = arith.constant 0 : index
    %16 = vector.load %arg5[%c0_7, %c0_8] : memref<13x32xf32, #tpu.memory_space<vmem>>, vector<13x32xf32>
    tpu.vector_store %arg5[%c0_7, %c0_8], %15 {strides = array<i32>} : memref<13x32xf32, #tpu.memory_space<vmem>>, vector<13x32xf32>,
    return
  }
  func.func @transform_0(%arg0: i32) -> (i32, i32) {
    %c0_i32 = arith.constant 0 : i32
    %c0_i32_0 = arith.constant 0 : i32
    return %arg0, %c0_i32 : i32, i32
  }
  func.func @transform_1(%arg0: i32) -> (i32, i32) {
    %c0_i32 = arith.constant 0 : i32
    %c0_i32_0 = arith.constant 0 : i32
    return %arg0, %c0_i32 : i32, i32
  }
  func.func @transform_2(%arg0: i32) -> (i32, i32) {
    %c0_i32 = arith.constant 0 : i32
    %c0_i32_0 = arith.constant 0 : i32
    %c0_i32_1 = arith.constant 0 : i32
    return %c0_i32, %c0_i32_0 : i32, i32
  }
  func.func @transform_3(%arg0: i32) -> (i32, i32) {
    %c0_i32 = arith.constant 0 : i32
    %c0_i32_0 = arith.constant 0 : i32
    %c0_i32_1 = arith.constant 0 : i32
    return %c0_i32, %c0_i32_0 : i32, i32
  }
  func.func @transform_4(%arg0: i32) -> (i32, i32) {
    %c0_i32 = arith.constant 0 : i32
    %c0_i32_0 = arith.constant 0 : i32
    return %arg0, %c0_i32 : i32, i32
  }
}

</mosaic_0001>

<llo_original>
// kernel: custom-call.1
$region0: #{custom-call.1}
  %s0 = inlined_call_operand.vmem [shape: u32[13], index: 0, kind: output, shape index: {}]

// kernel: point_layer_norm.2
$region0: #{point_layer_norm.2}
  #allocation0 [shape = 'u32[]', space=smem, size = 0x4, offset = 0x4, fixed_abs, tag = 'smem constant byte address 0x4 - core index']
  #allocation1 [shape = 'u32[144,128]{1,0:T(1,128)}', space=vmem, size = 0x12000, scoped, tag = 'internal scratch']
  %s0 = inlined_call_operand.vmem [shape: f32[13,32], index: 0, kind: input, shape index: {}]
  %s1 = inlined_call_operand.vmem [shape: f32[13,2], index: 1, kind: output, shape index: {}]
  %s2 = sld [smem:[#allocation0]]
  $region14: #{point_layer_norm.2} parent=0
    _
  %s4 = ssub.s32 1, %s2
  %s5 = scalar_select 0, %s4, %s2
  // Predicated region
  $region2: #{point_layer_norm.2} parent=0 // pred_check
    _
  $region3: #{point_layer_norm.2} parent=0 // pred_check_branch
    %7 = sbr.rel (0) target = $region5
  $region4: #{point_layer_norm.2} parent=0 // pred_region
    _
  $region5: #{point_layer_norm.2} parent=0 // pred_fallthru
    _
  %v8 = vld [vmem:[%s0] sm:$0xff]
  %v9 = vld [vmem:[%s0 + $0x8] sm:$0x1f]
  %vm10 = vcmask 261120
  %v11 = vsel %vm10, %v8, 0.0
  %12 = vadd.xlane.f32.xlu0 %v11
  %v13 = vpop.xlane.xlu0 %12
  %vm14 = vcmask 258048
  %v15 = vsel %vm14, %v9, 0.0
  %16 = vadd.xlane.f32.xlu0 %v15
  %v17 = vpop.xlane.xlu0 %16
  %vm18 = vcmask 7168
  %19 = vst.msk [vmem:[%s1] sm:$0xff] %vm18, %v13
  %vm20 = vcmask 4096
  %21 = vst.msk [vmem:[%s1 + $0x8] sm:$0x1f] %vm20, %v17
  %v22 = vmul.f32 %v8, %v8
  %v23 = vmul.f32 %v9, %v9
  %v24 = vsel %vm10, %v22, 0.0
  %25 = vadd.xlane.f32.xlu0 %v24
  %v26 = vpop.xlane.xlu0 %25
  %v27 = vsel %vm14, %v23, 0.0
  %28 = vadd.xlane.f32.xlu0 %v27
  %v29 = vpop.xlane.xlu0 %28
  %vm30 = vcmask 15368
  %31 = vst.msk [vmem:[%s1] sm:$0xff] %vm30, %v26
  %vm32 = vcmask 12296
  %33 = vst.msk [vmem:[%s1 + $0x8] sm:$0x1f] %vm32, %v29
  // Predicated region
  $region6: #{point_layer_norm.2} parent=0 // pred_check
    _
  $region7: #{point_layer_norm.2} parent=0 // pred_check_branch
    %35 = sbr.rel (0) target = $region9
  $region8: #{point_layer_norm.2} parent=0 // pred_region
    _
  $region9: #{point_layer_norm.2} parent=0 // pred_fallthru
    _
  // Predicated region
  $region10: #{point_layer_norm.2} parent=0 // pred_check
    _
  $region11: #{point_layer_norm.2} parent=0 // pred_check_branch
    %37 = sbr.rel (0) target = $region13
  $region12: #{point_layer_norm.2} parent=0 // pred_region
    _
  $region13: #{point_layer_norm.2} parent=0 // pred_fallthru
    _

// kernel: point_layer_norm.3
$region0: #{point_layer_norm.3}
  #allocation0 [shape = 'u32[]', space=smem, size = 0x4, offset = 0x4, fixed_abs, tag = 'smem constant byte address 0x4 - core index']
  #allocation1 [shape = 'u32[144,128]{1,0:T(1,128)}', space=vmem, size = 0x12000, scoped, tag = 'internal scratch']
  %s0 = inlined_call_operand.vmem [shape: f32[13,32], index: 0, kind: input, shape index: {}]
  %s1 = inlined_call_operand.vmem [shape: f32[13,2], index: 1, kind: input, shape index: {}]
  %s2 = inlined_call_operand.vmem [shape: f32[1,32], index: 2, kind: input, shape index: {}]
  %s3 = inlined_call_operand.vmem [shape: f32[1,32], index: 3, kind: input, shape index: {}]
  %s4 = inlined_call_operand.hbm [shape: f32[13,32], index: 4, kind: output, shape index: {}]
  %s5 = sld [smem:[#allocation0]]
  $region26: #{point_layer_norm.3} parent=0
    _
  %s7 = ssub.s32 1, %s5
  %s8 = scalar_select 0, %s7, %s5
  $region1: #{point_layer_norm.3} parent=0
    #allocation2 [shape = 'u8[8192]{0}', space=vmem, size = 0x2000, scoped, tag = 'output window, operand 0, single buffered']
    #allocation3 [shape = 's32[1]{0}', space=sflag, size = 0x4, scoped, tag = 'scoped memory for point_layer_norm.3']
    %9 = vsyncpa [#allocation3], 0
    // Predicated region
    $region2: #{point_layer_norm.3} parent=1 // pred_check
      _
    $region3: #{point_layer_norm.3} parent=1 // pred_check_branch
      %11 = sbr.rel (0) target = $region5
    $region4: #{point_layer_norm.3} parent=1 // pred_region
      _
    $region5: #{point_layer_norm.3} parent=1 // pred_fallthru
      _
    // Predicated region
    $region6: #{point_layer_norm.3} parent=1 // pred_check
      _
    $region7: #{point_layer_norm.3} parent=1 // pred_check_branch
      %13 = sbr.rel (0) target = $region9
    $region8: #{point_layer_norm.3} parent=1 // pred_region
      _
    $region9: #{point_layer_norm.3} parent=1 // pred_fallthru
      _
    // Predicated region
    $region10: #{point_layer_norm.3} parent=1 // pred_check
      _
    $region11: #{point_layer_norm.3} parent=1 // pred_check_branch
      %15 = sbr.rel (0) target = $region13
    $region12: #{point_layer_norm.3} parent=1 // pred_region
      _
    $region13: #{point_layer_norm.3} parent=1 // pred_fallthru
      _
    // Predicated region
    $region14: #{point_layer_norm.3} parent=1 // pred_check
      _
    $region15: #{point_layer_norm.3} parent=1 // pred_check_branch
      %17 = sbr.rel (0) target = $region17
    $region16: #{point_layer_norm.3} parent=1 // pred_region
      _
    $region17: #{point_layer_norm.3} parent=1 // pred_fallthru
      _
    %v18 = vld [vmem:[%s0] sm:$0xff]
    %v19 = vld [vmem:[%s0 + $0x8] sm:$0x1f]
    %v20 = vld [vmem:[%s1] sm:$0xff]
    %v21 = vld [vmem:[%s1 + $0x8] sm:$0x1f]
    %v22 = vld [vmem:[%s2] sm:$0x1]
    %v23 = vld [vmem:[%s3] sm:$0x1]
    %25 = vset.pattern.permute.xlu0 0
    %26 = vperm.xlu0 %25, %v20
    %v27 = vpop.permute.xlu0 %26
    %30 = vset.pattern.permute.xlu0 0
    %31 = vperm.xlu0 %30, %v21
    %v32 = vpop.permute.xlu0 %31
    %v35 = vlaneseq
    %v36 = vshrl.u32 %v35, 7
    %v37 = vsub.s32 0, %v36
    %v38 = vrot.slane %v22, %v37
    %v40 = vmul.f32 %v27, %v38
    %v41 = vmul.f32 %v32, %v38
    %v42 = vmul.f32 %v18, %v40
    %v43 = vmul.f32 %v19, %v41
    %44 = vset.pattern.permute.xlu0 1
    %45 = vperm.xlu0 %44, %v20
    %v46 = vpop.permute.xlu0 %45
    %48 = vset.pattern.permute.xlu0 1
    %49 = vperm.xlu0 %48, %v21
    %v50 = vpop.permute.xlu0 %49
    %v52 = vmul.f32 %v46, %v38
    %v53 = vmul.f32 %v50, %v38
    %v55 = vlaneseq
    %v56 = vshrl.u32 %v55, 7
    %v57 = vsub.s32 0, %v56
    %v58 = vrot.slane %v23, %v57
    %v60 = vadd.f32 %v52, %v58
    %v61 = vadd.f32 %v53, %v58
    %v62 = vadd.f32 %v42, %v60
    %v63 = vadd.f32 %v43, %v61
    %vm64 = vcmask 261120
    %65 = vst.msk [vmem:[#allocation2] sm:$0xff] %vm64, %v62
    %vm66 = vcmask 258048
    %67 = vst.msk [vmem:[#allocation2 + $0x8] sm:$0x1f] %vm66, %v63
    // Predicated region
    $region18: #{point_layer_norm.3} parent=1 // pred_check
      _
    $region19: #{point_layer_norm.3} parent=1 // pred_check_branch
      %69 = sbr.rel (0) target = $region21
    $region20: #{point_layer_norm.3} parent=1 // pred_region
      %s71 = ssub.s32 256, 256
      %72 = vsyncadd [#allocation3], %s71
      %s73 = sshll.u32 [#allocation2], 4
      %s74 = int_to_ptr.vmem [resolvable:$true] %s73
      %79 = dma.vmem_to_hbm [thread:$0]  %s74, 256, %s4, [#allocation3], 128, 128, 8
    $region21: #{point_layer_norm.3} parent=1 // pred_fallthru
      _
    // Predicated region
    $region22: #{point_layer_norm.3} parent=1 // pred_check
      _
    $region23: #{point_layer_norm.3} parent=1 // pred_check_branch
      %81 = sbr.rel (0) target = $region25
    $region24: #{point_layer_norm.3} parent=1 // pred_region
      %82 = dma.done [#allocation3], 256
    $region25: #{point_layer_norm.3} parent=1 // pred_fallthru
      _
    %83 = vsyncpa [#allocation3], 1

</llo_original>
